<compile_context>
chip_gen: v7x
topology: tpu7x:2x2x1
jax: 0.10.0
libtpu: 0.0.40
codegen_flags: <defaults>
</compile_context>

<pallas_src>
import jax
import jax.numpy as jnp
from jax.experimental import pallas as pl
from jax.experimental.pallas import tpu as pltpu


def _round_up(x: int, m: int) -> int:
    return (x + m - 1) // m * m


# ---------------------------------------------------------------------------
# Kernel: one fused matmul + bias.
#   x_ref: (tm, Dp)   w_ref: (Dp, tc)   b_ref: (1, tc) f32   o_ref: (tm, tc)
# ---------------------------------------------------------------------------
def classifier_kernel(x_ref, w_ref, b_ref, o_ref):
    acc = jnp.dot(x_ref[...], w_ref[...], preferred_element_type=jnp.float32)
    o_ref[...] = (acc + b_ref[...]).astype(o_ref.dtype)


# ---------------------------------------------------------------------------
# One-time weight preparation (hoist this out of the per-step call path).
# Each branch = (gamma, beta, running_mean, running_var, W, b),
#   W: (num_classes, dim), b: (num_classes,).
# branch2=None reproduces distillation=False.
# ---------------------------------------------------------------------------
def fuse_classifier_params(branch1, branch2=None, *, eps=1e-5,
                           dtype=jnp.float32, tc_max=512):
    C, D = branch1[4].shape

    def fold(gamma, beta, mean, var, W, b):
        s = gamma.astype(jnp.float32) * jax.lax.rsqrt(
            var.astype(jnp.float32) + jnp.float32(eps))
        t = beta.astype(jnp.float32) - mean.astype(jnp.float32) * s
        Wt = W.astype(jnp.float32).T                      # (D, C)
        return s[:, None] * Wt, t @ Wt + b.astype(jnp.float32)

    W1, b1 = fold(*branch1)
    if branch2 is None:
        Wf, bf = W1, b1
    else:
        W2, b2 = fold(*branch2)
        Wf = 0.5 * (W1 + W2)
        bf = 0.5 * (b1 + b2)

    # Pad lane dims to x128; pad the class dim so the tile size divides it.
    Dp = _round_up(D, 128)
    Cp = _round_up(C, 128)
    tc = min(tc_max, Cp)
    Cp = _round_up(Cp, tc)

    Wp = jnp.pad(Wf, ((0, Dp - D), (0, Cp - C))).astype(dtype)   # (Dp, Cp)
    bp = jnp.pad(bf, (0, Cp - C))[None, :].astype(jnp.float32)   # (1, Cp)
    return Wp, bp, (D, C, tc)


# ---------------------------------------------------------------------------
# Forward: only x is touched per call; weights come pre-fused / pre-padded.
# ---------------------------------------------------------------------------
def classifier_forward(x, w_fused, b_fused, meta, *, tm_max=256):
    N, D = x.shape
    Dp, Cp = w_fused.shape
    D_logical, C, tc = meta
    assert D == D_logical, "x feature dim does not match fused weights"
    dtype = x.dtype

    tm = min(tm_max, _round_up(N, 8))
    Np = _round_up(N, tm)

    # Pad x only when actually required (skips a full HBM pass otherwise).
    if (Np, Dp) != (N, D):
        xp = jnp.pad(x, ((0, Np - N), (0, Dp - D)))
    else:
        xp = x

    itemsize = jnp.dtype(dtype).itemsize
    w_itemsize = jnp.dtype(w_fused.dtype).itemsize

    # Per-step VMEM (each block double-buffered by the pipeline).
    block_bytes = (tm * Dp * itemsize        # x block
                   + Dp * tc * w_itemsize    # fused weight block
                   + tc * 4                  # bias block (f32)
                   + tm * tc * itemsize)     # output block
    try:
        vmem_cap = int(pltpu.get_tpu_info().vmem_capacity_bytes)
    except Exception:
        vmem_cap = 64 << 20                  # conservative (v7x per-TC)
    vmem_limit = int(min(vmem_cap * 3 // 4,
                         max(2 * block_bytes + (2 << 20), 16 << 20)))

    cost = pl.CostEstimate(
        flops=2 * Np * Dp * Cp + Np * Cp,
        transcendentals=0,
        bytes_accessed=(Np * Dp + Np * Cp) * itemsize
                       + Dp * Cp * w_itemsize + Cp * 4,
    )

    grid = (Cp // tc, Np // tm)   # class outer, batch innermost:
                                  # each weight block is fetched once.

    out_p = pl.pallas_call(
        classifier_kernel,
        out_shape=jax.ShapeDtypeStruct((Np, Cp), dtype),
        grid_spec=pltpu.PrefetchScalarGridSpec(
            num_scalar_prefetch=0,
            grid=grid,
            in_specs=[
                pl.BlockSpec((tm, Dp), lambda j, i: (i, 0)),   # x
                pl.BlockSpec((Dp, tc), lambda j, i: (0, j)),   # W_fused
                pl.BlockSpec((1, tc), lambda j, i: (0, j)),    # b_fused
            ],
            out_specs=pl.BlockSpec((tm, tc), lambda j, i: (i, j)),
        ),
        compiler_params=pltpu.CompilerParams(
            dimension_semantics=("parallel", "parallel"),
            vmem_limit_bytes=vmem_limit,
        ),
        cost_estimate=cost,
    )(xp, w_fused, b_fused)

    return out_p[:N, :C]


def classifier_apply(x, branch1, branch2=None, *, eps=1e-5,
                     tm_max=256, tc_max=512):
    """Convenience: fuse + forward. In real use, hoist the fuse step."""
    w_fused, b_fused, meta = fuse_classifier_params(
        branch1, branch2, eps=eps, dtype=x.dtype, tc_max=tc_max)
    return classifier_forward(x, w_fused, b_fused, meta, tm_max=tm_max)


# ---------------------------------------------------------------------------
# Pure-JAX reference mirroring the PyTorch forward (eval-mode BN).
# ---------------------------------------------------------------------------
def classifier_ref(x, branch1, branch2=None, eps=1e-5):
    def bn_linear(x, gamma, beta, mean, var, W, b):
        xn = (x - mean) / jnp.sqrt(var + eps) * gamma + beta
        return xn @ W.T + b
    y1 = bn_linear(x, *branch1)
    if branch2 is None:
        return y1
    y2 = bn_linear(x, *branch2)
    return 0.5 * (y1 + y2)


if __name__ == "__main__":
    # Small shapes consistent with the module: batch=2, dim=32, num_classes=10,
    # distillation=True (two BnLinear branches averaged).
    N, D, NUM_CLASSES = 2, 32, 10
    EPS = 1e-5

    key = jax.random.PRNGKey(0)
    keys = jax.random.split(key, 13)

    x = jax.random.normal(keys[0], (N, D), dtype=jnp.float32)

    def make_branch(ks):
        gamma = 1.0 + 0.1 * jax.random.normal(ks[0], (D,), dtype=jnp.float32)
        beta = 0.1 * jax.random.normal(ks[1], (D,), dtype=jnp.float32)
        mean = 0.1 * jax.random.normal(ks[2], (D,), dtype=jnp.float32)
        var = 0.5 + jnp.abs(jax.random.normal(ks[3], (D,), dtype=jnp.float32))
        W = 0.02 * jax.random.normal(ks[4], (NUM_CLASSES, D), dtype=jnp.float32)
        b = 0.01 * jax.random.normal(ks[5], (NUM_CLASSES,), dtype=jnp.float32)
        return (gamma, beta, mean, var, W, b)

    branch1 = make_branch(keys[1:7])
    branch2 = make_branch(keys[7:13])

    # distillation=True path (fuse once, then forward).
    w_fused, b_fused, meta = fuse_classifier_params(
        branch1, branch2, eps=EPS, dtype=x.dtype)
    out = jax.block_until_ready(classifier_forward(x, w_fused, b_fused, meta))
    ref = classifier_ref(x, branch1, branch2, eps=EPS)
    assert out.shape == (N, NUM_CLASSES)
    assert jnp.allclose(out, ref, atol=1e-4, rtol=1e-4), "mismatch vs reference"

    # distillation=False path (single branch).
    out_single = jax.block_until_ready(classifier_apply(x, branch1, None, eps=EPS))
    ref_single = classifier_ref(x, branch1, None, eps=EPS)
    assert jnp.allclose(out_single, ref_single, atol=1e-4, rtol=1e-4)

    print("KERNEL_OK")
</pallas_src>

<mosaic_0001>
module attributes {stable_mosaic.version = 11 : i64} {
  func.func @classifier_kernel(%arg0: i32, %arg1: i32, %arg2: memref<8x128xf32, #tpu.memory_space<vmem>>, %arg3: memref<128x128xf32, #tpu.memory_space<vmem>>, %arg4: memref<1x128xf32, #tpu.memory_space<vmem>>, %arg5: memref<8x128xf32, #tpu.memory_space<vmem>>) attributes {dimension_semantics = [#tpu.dimension_semantics<parallel>, #tpu.dimension_semantics<parallel>], iteration_bounds = array<i64: 1, 1>, scalar_prefetch = 0 : i64, scratch_operands = 0 : i64, tpu.core_type = #tpu.core_type<tc>, window_params = [{transform_indices = @transform_0, window_bounds = array<i64: 8, 128>}, {transform_indices = @transform_1, window_bounds = array<i64: 128, 128>}, {transform_indices = @transform_2, window_bounds = array<i64: 1, 128>}, {transform_indices = @transform_3, window_bounds = array<i64: 8, 128>}]} {
    %c0 = arith.constant 0 : index
    %c0_0 = arith.constant 0 : index
    %0 = vector.load %arg2[%c0, %c0_0] : memref<8x128xf32, #tpu.memory_space<vmem>>, vector<8x128xf32>
    %c0_1 = arith.constant 0 : index
    %c0_2 = arith.constant 0 : index
    %1 = vector.load %arg3[%c0_1, %c0_2] : memref<128x128xf32, #tpu.memory_space<vmem>>, vector<128x128xf32>
    %cst = arith.constant dense<0.000000e+00> : vector<8x128xf32>
    %2 = tpu.matmul %0, %1, %cst {dimension_numbers = #tpu.dot_dimension_numbers<[1], [0], [0], [1], [0, 0, 1, 1], [], []>} : vector<8x128xf32>, vector<128x128xf32>, vector<8x128xf32> -> vector<8x128xf32>
    %c0_3 = arith.constant 0 : index
    %c0_4 = arith.constant 0 : index
    %3 = vector.load %arg4[%c0_3, %c0_4] : memref<1x128xf32, #tpu.memory_space<vmem>>, vector<1x128xf32>
    %4 = vector.broadcast %3 : vector<1x128xf32> to vector<8x128xf32>
    %5 = arith.addf %2, %4 : vector<8x128xf32>
    %c0_5 = arith.constant 0 : index
    %c0_6 = arith.constant 0 : index
    %6 = vector.load %arg5[%c0_5, %c0_6] : memref<8x128xf32, #tpu.memory_space<vmem>>, vector<8x128xf32>
    tpu.vector_store %arg5[%c0_5, %c0_6], %5 {strides = array<i32>} : memref<8x128xf32, #tpu.memory_space<vmem>>, vector<8x128xf32>,
    return
  }
  func.func @transform_0(%arg0: i32, %arg1: i32) -> (i32, i32) {
    %c0_i32 = arith.constant 0 : i32
    %c0_i32_0 = arith.constant 0 : i32
    return %arg1, %c0_i32 : i32, i32
  }
  func.func @transform_1(%arg0: i32, %arg1: i32) -> (i32, i32) {
    %c0_i32 = arith.constant 0 : i32
    %c0_i32_0 = arith.constant 0 : i32
    return %c0_i32, %arg0 : i32, i32
  }
  func.func @transform_2(%arg0: i32, %arg1: i32) -> (i32, i32) {
    %c0_i32 = arith.constant 0 : i32
    %c0_i32_0 = arith.constant 0 : i32
    return %c0_i32, %arg0 : i32, i32
  }
  func.func @transform_3(%arg0: i32, %arg1: i32) -> (i32, i32) {
    %c0_i32 = arith.constant 0 : i32
    return %arg1, %arg0 : i32, i32
  }
}

</mosaic_0001>

<llo_original>
// kernel: tpu_custom_call.1
$region0: #{tpu_custom_call.1}
  #allocation0 [shape = 'u32[]', space=smem, size = 0x4, offset = 0x4, fixed_abs, tag = 'smem constant byte address 0x4 - core index']
  #allocation1 [shape = 'u32[144,128]{1,0:T(1,128)}', space=vmem, size = 0x12000, scoped, tag = 'internal scratch']
  %s0 = inlined_call_operand.hbm [shape: f32[8,128], index: 0, kind: input, shape index: {}]
  %s1 = inlined_call_operand.hbm [shape: f32[128,128], index: 1, kind: input, shape index: {}]
  %s2 = inlined_call_operand.vmem [shape: f32[1,128], index: 2, kind: input, shape index: {}]
  %s3 = inlined_call_operand.hbm [shape: f32[8,128], index: 3, kind: output, shape index: {}]
  %s4 = sld [smem:[#allocation0]]
  $region30: #{tpu_custom_call.1} parent=0
    _
  %s6 = ssub.s32 1, %s4
  %s7 = scalar_select 0, %s6, %s4
  $region1: #{tpu_custom_call.1} parent=0
    #allocation2 [shape = 'u8[4096]{0}', space=vmem, size = 0x1000, scoped, tag = 'input window, operand 0, single buffered']
    #allocation3 [shape = 's32[1]{0}', space=sflag, size = 0x4, scoped, tag = 'scoped memory for tpu_custom_call.1']
    #allocation4 [shape = 's32[1]{0}', space=sflag, size = 0x4, scoped, tag = 'scoped memory for tpu_custom_call.1']
    #allocation5 [shape = 'u8[65536]{0}', space=vmem, size = 0x10000, scoped, tag = 'input window, operand 1, single buffered']
    #allocation6 [shape = 's32[1]{0}', space=sflag, size = 0x4, scoped, tag = 'scoped memory for tpu_custom_call.1']
    #allocation7 [shape = 'u8[4096]{0}', space=vmem, size = 0x1000, scoped, tag = 'output window, operand 0, single buffered']
    %8 = vsyncpa [#allocation3], 0
    %9 = vsyncpa [#allocation6], 0
    %10 = vsyncpa [#allocation4], 0
    // Predicated region
    $region2: #{tpu_custom_call.1} parent=1 // pred_check
      _
    $region3: #{tpu_custom_call.1} parent=1 // pred_check_branch
      %12 = sbr.rel (0) target = $region5
    $region4: #{tpu_custom_call.1} parent=1 // pred_region
      %s14 = ssub.s32 128, 128
      %15 = vsyncadd [#allocation3], %s14
      %s17 = sshll.u32 [#allocation2], 4
      %s18 = int_to_ptr.vmem [resolvable:$true] %s17
      %20 = dma.hbm_to_vmem [thread:$0]  %s0, 128, %s18, [#allocation3]
    $region5: #{tpu_custom_call.1} parent=1 // pred_fallthru
      _
    // Predicated region
    $region6: #{tpu_custom_call.1} parent=1 // pred_check
      _
    $region7: #{tpu_custom_call.1} parent=1 // pred_check_branch
      %22 = sbr.rel (0) target = $region9
    $region8: #{tpu_custom_call.1} parent=1 // pred_region
      %s24 = ssub.s32 2048, 2048
      %25 = vsyncadd [#allocation6], %s24
      %s26 = sshll.u32 [#allocation5], 4
      %s27 = int_to_ptr.vmem [resolvable:$true] %s26
      %32 = dma.hbm_to_vmem [thread:$0]  %s1, 2048, %s27, [#allocation6], 128, 128, 8
    $region9: #{tpu_custom_call.1} parent=1 // pred_fallthru
      _
    // Predicated region
    $region10: #{tpu_custom_call.1} parent=1 // pred_check
      _
    $region11: #{tpu_custom_call.1} parent=1 // pred_check_branch
      %34 = sbr.rel (0) target = $region13
    $region12: #{tpu_custom_call.1} parent=1 // pred_region
      _
    $region13: #{tpu_custom_call.1} parent=1 // pred_fallthru
      _
    // Predicated region
    $region14: #{tpu_custom_call.1} parent=1 // pred_check
      _
    $region15: #{tpu_custom_call.1} parent=1 // pred_check_branch
      %36 = sbr.rel (0) target = $region17
    $region16: #{tpu_custom_call.1} parent=1 // pred_region
      %37 = dma.done [#allocation3], 128
    $region17: #{tpu_custom_call.1} parent=1 // pred_fallthru
      _
    // Predicated region
    $region18: #{tpu_custom_call.1} parent=1 // pred_check
      _
    $region19: #{tpu_custom_call.1} parent=1 // pred_check_branch
      %39 = sbr.rel (0) target = $region21
    $region20: #{tpu_custom_call.1} parent=1 // pred_region
      %40 = dma.done [#allocation6], 2048
    $region21: #{tpu_custom_call.1} parent=1 // pred_fallthru
      _
    %v41 = vld [vmem:[#allocation2] sm:$0xff]
    %v42 = vld [vmem:[#allocation5] sm:$0xff]
    %v43 = vld [vmem:[#allocation5 + $0x8] sm:$0xff]
    %v44 = vld [vmem:[#allocation5 + $0x10] sm:$0xff]
    %v45 = vld [vmem:[#allocation5 + $0x18] sm:$0xff]
    %v46 = vld [vmem:[#allocation5 + $0x20] sm:$0xff]
    %v47 = vld [vmem:[#allocation5 + $0x28] sm:$0xff]
    %v48 = vld [vmem:[#allocation5 + $0x30] sm:$0xff]
    %v49 = vld [vmem:[#allocation5 + $0x38] sm:$0xff]
    %v50 = vld [vmem:[#allocation5 + $0x40] sm:$0xff]
    %v51 = vld [vmem:[#allocation5 + $0x48] sm:$0xff]
    %v52 = vld [vmem:[#allocation5 + $0x50] sm:$0xff]
    %v53 = vld [vmem:[#allocation5 + $0x58] sm:$0xff]
    %v54 = vld [vmem:[#allocation5 + $0x60] sm:$0xff]
    %v55 = vld [vmem:[#allocation5 + $0x68] sm:$0xff]
    %v56 = vld [vmem:[#allocation5 + $0x70] sm:$0xff]
    %v57 = vld [vmem:[#allocation5 + $0x78] sm:$0xff]
    %v58 = vld [vmem:[%s2] sm:$0x1]
    %v60 = vlaneseq
    %v61 = vshrl.u32 %v60, 7
    %v62 = vsub.s32 0, %v61
    %v63 = vrot.slane %v58, %v62
    %65 = vmatprep.subr.mxu0 0.0
    %66 = vmatpush1.msra.mxu0 %v42
    %67 = vmatprep.subr.mxu0 0.0
    %68 = vmatpush1.msra.mxu0 %v43
    %69 = vmatprep.subr.mxu0 0.0
    %70 = vmatpush1.msra.mxu0 %v44
    %71 = vmatprep.subr.mxu0 0.0
    %72 = vmatpush1.msra.mxu0 %v45
    %73 = vmatprep.subr.mxu0 0.0
    %74 = vmatpush1.msra.mxu0 %v46
    %75 = vmatprep.subr.mxu0 0.0
    %76 = vmatpush1.msra.mxu0 %v47
    %77 = vmatprep.subr.mxu0 0.0
    %78 = vmatpush1.msra.mxu0 %v48
    %79 = vmatprep.subr.mxu0 0.0
    %80 = vmatpush1.msra.mxu0 %v49
    %81 = vmatprep.subr.mxu0 0.0
    %82 = vmatpush1.msra.mxu0 %v50
    %83 = vmatprep.subr.mxu0 0.0
    %84 = vmatpush1.msra.mxu0 %v51
    %85 = vmatprep.subr.mxu0 0.0
    %86 = vmatpush1.msra.mxu0 %v52
    %87 = vmatprep.subr.mxu0 0.0
    %88 = vmatpush1.msra.mxu0 %v53
    %89 = vmatprep.subr.mxu0 0.0
    %90 = vmatpush1.msra.mxu0 %v54
    %91 = vmatprep.subr.mxu0 0.0
    %92 = vmatpush1.msra.mxu0 %v55
    %93 = vmatprep.subr.mxu0 0.0
    %94 = vmatpush1.msra.mxu0 %v56
    %95 = vmatprep.subr.mxu0 0.0
    %96 = vmatpush1.msra.mxu0 %v57
    %97 = vmatprep.subr.mxu0 0.0
    %98 = vmatpush1.msra.mxu0 0.0
    %99 = vmatprep.subr.mxu0 0.0
    %100 = vmatpush1.msra.mxu0 0.0
    %101 = vmatprep.subr.mxu0 0.0
    %102 = vmatpush1.msra.mxu0 0.0
    %103 = vmatprep.subr.mxu0 0.0
    %104 = vmatpush1.msra.mxu0 0.0
    %105 = vmatprep.subr.mxu0 0.0
    %106 = vmatpush1.msra.mxu0 0.0
    %107 = vmatprep.subr.mxu0 0.0
    %108 = vmatpush1.msra.mxu0 0.0
    %109 = vmatprep.subr.mxu0 0.0
    %110 = vmatpush1.msra.mxu0 0.0
    %111 = vmatprep.subr.mxu0 0.0
    %112 = vmatpush1.msra.mxu0 0.0
    %113 = vmatprep.subr.mxu0 0.0
    %114 = vmatpush1.msra.mxu0 0.0
    %115 = vmatprep.subr.mxu0 0.0
    %116 = vmatpush1.msra.mxu0 0.0
    %117 = vmatprep.subr.mxu0 0.0
    %118 = vmatpush1.msra.mxu0 0.0
    %119 = vmatprep.subr.mxu0 0.0
    %120 = vmatpush1.msra.mxu0 0.0
    %121 = vmatprep.subr.mxu0 0.0
    %122 = vmatpush1.msra.mxu0 0.0
    %123 = vmatprep.subr.mxu0 0.0
    %124 = vmatpush1.msra.mxu0 0.0
    %125 = vmatprep.subr.mxu0 0.0
    %126 = vmatpush1.msra.mxu0 0.0
    %127 = vmatprep.subr.mxu0 0.0
    %128 = vmatpush1.msra.mxu0 0.0
    %129 = vmatprep.mubr.f32.mxu0 0.0
    %130 = vmatmul.mubr.f32.gmra.mrb[0].mxu0 %v41
    %v131 = vpop.f32.mrb[0].mxu0
    %v132 = vadd.f32 %v63, %v131
    %v133 = vpop.f32.mrb[0].mxu0
    %134 = vdwg.mxu0
    %135 = vst [vmem:[#allocation7] sm:$0xff] %v132
    // Predicated region
    $region22: #{tpu_custom_call.1} parent=1 // pred_check
      _
    $region23: #{tpu_custom_call.1} parent=1 // pred_check_branch
      %137 = sbr.rel (0) target = $region25
    $region24: #{tpu_custom_call.1} parent=1 // pred_region
      %s139 = ssub.s32 128, 128
      %140 = vsyncadd [#allocation4], %s139
      %s142 = sshll.u32 [#allocation7], 4
      %s143 = int_to_ptr.vmem [resolvable:$true] %s142
      %145 = dma.vmem_to_hbm [thread:$0]  %s143, 128, %s3, [#allocation4]
    $region25: #{tpu_custom_call.1} parent=1 // pred_fallthru
      _
    // Predicated region
    $region26: #{tpu_custom_call.1} parent=1 // pred_check
      _
    $region27: #{tpu_custom_call.1} parent=1 // pred_check_branch
      %147 = sbr.rel (0) target = $region29
    $region28: #{tpu_custom_call.1} parent=1 // pred_region
      %148 = dma.done [#allocation4], 128
    $region29: #{tpu_custom_call.1} parent=1 // pred_fallthru
      _
    %149 = vsyncpa [#allocation3], 1
    %150 = vsyncpa [#allocation6], 1
    %151 = vsyncpa [#allocation4], 1

</llo_original>
